<compile_context>
chip_gen: v6e
topology: v6e:2x2x1
jax: 0.10.0
libtpu: 0.0.40
codegen_flags: <defaults>
</compile_context>

<pallas_src>
import jax
import jax.numpy as jnp
from jax.experimental import pallas as pl
from jax.experimental.pallas import tpu as pltpu

EPS = 1e-5      # BatchNorm1d eps
SLOPE = 0.2     # LeakyReLU negative slope

_HIDDEN = (256, 128, 64, 32)   # hidden widths; final Linear -> 2
_OUT = 2


def _round_up(x, m):
    return ((x + m - 1) // m) * m


# ---------------------------------------------------------------------------
# Kernel: one batch tile through the whole folded MLP.
#   x_ref:  (bn, D)            input tile
#   wX_ref: (din, dout)        folded Linear weights (f32 or bf16)
#   b_ref:  (8, 256) f32       packed biases: row l holds layer-l bias in [:dout]
#   out_ref:(bn, 2)  f32       output tile
# ---------------------------------------------------------------------------
def pressure_net_kernel(x_ref, w1_ref, w2_ref, w3_ref, w4_ref, w5_ref, b_ref,
                        out_ref):
    wdt = w1_ref.dtype  # MXU operand dtype; accumulation is always f32

    def hidden_layer(h, w_ref, layer_idx, dout):
        # f32 accumulate + f32 bias add, then LeakyReLU + downcast in wdt
        # (packed bf16 VALU on v6e/v7x when wdt == bf16).
        y = (jnp.dot(h, w_ref[...], preferred_element_type=jnp.float32)
             + b_ref[layer_idx:layer_idx + 1, 0:dout]).astype(wdt)
        return jnp.maximum(y, SLOPE * y)

    h = x_ref[...].astype(wdt)
    h = hidden_layer(h, w1_ref, 0, 256)
    h = hidden_layer(h, w2_ref, 1, 128)
    h = hidden_layer(h, w3_ref, 2, 64)
    h = hidden_layer(h, w4_ref, 3, 32)
    out_ref[...] = (
        jnp.dot(h, w5_ref[...], preferred_element_type=jnp.float32)
        + b_ref[4:5, 0:_OUT]
    ).astype(out_ref.dtype)


# ---------------------------------------------------------------------------
# Parameter construction (matches PressureNet._init_weights, eval-mode BN).
# ---------------------------------------------------------------------------
def init_params(key, input_dim):
    """Raw (unfolded) params: [s0, t0] + [w, b, s, t]x4 + [w, b].

    Weights are stored transposed, shape (in, out), so forward is x @ W.
    BN eval-mode is represented as per-feature (scale, shift) vectors.
    """
    dims = [(input_dim, 256), (256, 128), (128, 64), (64, 32), (32, _OUT)]
    bn_scale = 1.0 / jnp.sqrt(jnp.float32(1.0) + EPS)  # gamma=1, beta=0, mean=0, var=1

    flat = [
        jnp.full((1, input_dim), bn_scale, jnp.float32),   # s0 (input_norm scale)
        jnp.zeros((1, input_dim), jnp.float32),            # t0 (input_norm shift)
    ]
    keys = jax.random.split(key, len(dims))
    for li, (k, (din, dout)) in enumerate(zip(keys, dims)):
        # kaiming_normal_(mode='fan_out', nonlinearity='leaky_relu'): std = sqrt(2/fan_out)
        std = (2.0 / dout) ** 0.5
        w = std * jax.random.normal(k, (din, dout), jnp.float32)   # already (in, out) = W^T
        b = jnp.zeros((1, dout), jnp.float32)
        flat += [w, b]
        if li < len(dims) - 1:  # every Linear except the final one is followed by BN
            flat += [
                jnp.full((1, dout), bn_scale, jnp.float32),
                jnp.zeros((1, dout), jnp.float32),
            ]
    return flat


def fold_params(flat, weight_dtype=jnp.bfloat16):
    """Fold eval-mode BN affines into the adjacent Linears.

      input BN:  (x*s0 + t0) @ W1 + b1  ->  x @ (s0^T * W1) + (t0 @ W1 + b1)
      post BN i: (x @ Wi + bi)*si + ti  ->  x @ (Wi * si)   + (bi*si + ti)

    Returns [w1..w5, b_packed]; weights cast to `weight_dtype` (bf16 default for
    the MXU fast path on v6e/v7x; pass jnp.float32 for a bit-tight f32 path or
    on v5e), biases packed into one (8, 256) f32 array (row l = layer-l bias).
    """
    s0, t0 = flat[0], flat[1]
    idx = 2
    weights, biases = [], []
    for layer in range(5):
        w, b = flat[idx], flat[idx + 1]
        idx += 2
        if layer == 0:
            b = (t0 @ w).reshape(1, -1) + b
            w = s0.reshape(-1, 1) * w
        if layer < 4:  # BN follows this Linear
            s, t = flat[idx], flat[idx + 1]
            idx += 2
            w = w * s
            b = b * s + t
        weights.append(w.astype(weight_dtype))
        biases.append(b.astype(jnp.float32))

    b_packed = jnp.zeros((8, 256), jnp.float32)  # sublane-padded, lane-aligned
    for li, b in enumerate(biases):
        b_packed = b_packed.at[li, :b.shape[1]].set(b[0])
    return weights + [b_packed]


# ---------------------------------------------------------------------------
# Tile / VMEM sizing
# ---------------------------------------------------------------------------
def _choose_block_n(N, block_n):
    """Large tiles (amortize ~0.35us/step), but keep >=2 grid steps when N>256
    so the 'parallel' batch axis shards across v7x's 2 TensorCores."""
    n_pad = _round_up(N, 8)
    half = _round_up(pl.cdiv(N, 2), 256)
    bn = min(block_n, half, n_pad)
    return max(8, _round_up(bn, 8))


def _vmem_limit_bytes(bn, D, params):
    param_bytes = sum(int(p.size) * p.dtype.itemsize for p in params)
    wdt_bytes = jnp.dtype(params[0].dtype).itemsize
    hidden = sum(_HIDDEN)
    est = (2 * bn * D * 4                      # double-buffered input tiles
           + 2 * bn * _OUT * 4                 # double-buffered output tiles
           + 2 * param_bytes                   # double-buffered params
           + bn * hidden * 4                   # f32 accum / bias-add temporaries
           + bn * (hidden + D) * wdt_bytes)    # matmul-operand copies
    # 2x headroom, >=32 MiB, capped at 48 MiB (safe under v7x's 64 MiB physical).
    return int(min(max(2 * est, 32 << 20), 48 << 20))


# ---------------------------------------------------------------------------
# Wrapper
# ---------------------------------------------------------------------------
def pressure_net_forward(x, folded_params, block_n=2048):
    # For very large D in production, pass x already in bf16 to halve HBM input
    # traffic; the kernel casts to the weight dtype either way.
    N, D = x.shape
    bn = _choose_block_n(N, block_n)
    grid = (pl.cdiv(N, bn),)

    weights = folded_params[:5]
    flops = 2 * N * sum(din * dout for din, dout in (w.shape for w in weights))
    bytes_accessed = (int(x.size) * x.dtype.itemsize
                      + sum(int(p.size) * p.dtype.itemsize for p in folded_params)
                      + N * _OUT * 4)
    cost = pl.CostEstimate(flops=flops, transcendentals=0,
                           bytes_accessed=bytes_accessed)

    # Parameters are tiny: full extent, same block every grid step.
    param_specs = [pl.BlockSpec(p.shape, lambda i: (0, 0)) for p in folded_params]

    return pl.pallas_call(
        pressure_net_kernel,
        out_shape=jax.ShapeDtypeStruct((N, _OUT), jnp.float32),
        grid=grid,
        in_specs=[pl.BlockSpec((bn, D), lambda i: (i, 0))] + param_specs,
        out_specs=pl.BlockSpec((bn, _OUT), lambda i: (i, 0)),
        compiler_params=pltpu.CompilerParams(
            dimension_semantics=("parallel",),
            vmem_limit_bytes=_vmem_limit_bytes(bn, D, folded_params)),
        cost_estimate=cost,
    )(x, *folded_params)


# ---------------------------------------------------------------------------
# Pure-JAX reference of the same eval-mode forward (unfolded f32 params).
# ---------------------------------------------------------------------------
def ref_forward(x, flat):
    h = x * flat[0] + flat[1]
    idx = 2
    for layer in range(5):
        w, b = flat[idx], flat[idx + 1]
        idx += 2
        h = h @ w + b
        if layer < 4:
            s, t = flat[idx], flat[idx + 1]
            idx += 2
            y = h * s + t
            h = jnp.maximum(y, SLOPE * y)
    return h


if __name__ == "__main__":
    key = jax.random.PRNGKey(0)
    kx, kp = jax.random.split(key)

    N, INPUT_DIM = 64, 16
    x = jax.random.normal(kx, (N, INPUT_DIM), jnp.float32)

    raw_params = init_params(kp, INPUT_DIM)
    ref = ref_forward(x, raw_params)

    # f32 weight path: tight check against the reference.
    folded_f32 = fold_params(raw_params, jnp.float32)
    out_f32 = jax.block_until_ready(pressure_net_forward(x, folded_f32))
    assert out_f32.shape == (N, _OUT), out_f32.shape
    assert jnp.allclose(out_f32, ref, atol=1e-4, rtol=1e-4)

    # Multi-tile grid (exercises pipelining / v7x megacore sharding).
    out_tiled = jax.block_until_ready(pressure_net_forward(x, folded_f32, block_n=16))
    assert jnp.allclose(out_tiled, ref, atol=1e-4, rtol=1e-4)

    # Ragged / small N exercises the OOB-padded last tile.
    out_small = jax.block_until_ready(pressure_net_forward(x[:5], folded_f32))
    assert out_small.shape == (5, _OUT)
    assert jnp.allclose(out_small, ref[:5], atol=1e-4, rtol=1e-4)

    # Production default: bf16 MXU operands + bf16 epilogue, f32 accumulation.
    folded_bf16 = fold_params(raw_params)
    out_bf16 = jax.block_until_ready(pressure_net_forward(x, folded_bf16))
    assert out_bf16.shape == (N, _OUT)
    assert jnp.allclose(out_bf16, ref, atol=1e-1, rtol=5e-2)

    print("KERNEL_OK")
</pallas_src>

<mosaic_0001>
module attributes {stable_mosaic.version = 11 : i64} {
  func.func @pressure_net_kernel(%arg0: i32, %arg1: memref<64x16xf32, #tpu.memory_space<vmem>>, %arg2: memref<16x256xf32, #tpu.memory_space<vmem>>, %arg3: memref<256x128xf32, #tpu.memory_space<vmem>>, %arg4: memref<128x64xf32, #tpu.memory_space<vmem>>, %arg5: memref<64x32xf32, #tpu.memory_space<vmem>>, %arg6: memref<32x2xf32, #tpu.memory_space<vmem>>, %arg7: memref<8x256xf32, #tpu.memory_space<vmem>>, %arg8: memref<64x2xf32, #tpu.memory_space<vmem>>) attributes {dimension_semantics = [#tpu.dimension_semantics<parallel>], iteration_bounds = array<i64: 1>, scalar_prefetch = 0 : i64, scratch_operands = 0 : i64, tpu.core_type = #tpu.core_type<tc>, window_params = [{transform_indices = @transform_0, window_bounds = array<i64: 64, 16>}, {pipeline_mode = #tpu.pipeline_mode<synchronous>, transform_indices = @transform_1, window_bounds = array<i64: 16, 256>}, {pipeline_mode = #tpu.pipeline_mode<synchronous>, transform_indices = @transform_2, window_bounds = array<i64: 256, 128>}, {pipeline_mode = #tpu.pipeline_mode<synchronous>, transform_indices = @transform_3, window_bounds = array<i64: 128, 64>}, {pipeline_mode = #tpu.pipeline_mode<synchronous>, transform_indices = @transform_4, window_bounds = array<i64: 64, 32>}, {pipeline_mode = #tpu.pipeline_mode<synchronous>, transform_indices = @transform_5, window_bounds = array<i64: 32, 2>}, {pipeline_mode = #tpu.pipeline_mode<synchronous>, transform_indices = @transform_6, window_bounds = array<i64: 8, 256>}, {transform_indices = @transform_7, window_bounds = array<i64: 64, 2>}]} {
    %c0 = arith.constant 0 : index
    %c0_0 = arith.constant 0 : index
    %0 = vector.load %arg1[%c0, %c0_0] : memref<64x16xf32, #tpu.memory_space<vmem>>, vector<64x16xf32>
    %c0_1 = arith.constant 0 : index
    %c0_2 = arith.constant 0 : index
    %1 = vector.load %arg2[%c0_1, %c0_2] : memref<16x256xf32, #tpu.memory_space<vmem>>, vector<16x256xf32>
    %cst = arith.constant dense<0.000000e+00> : vector<64x256xf32>
    %2 = tpu.matmul %0, %1, %cst {dimension_numbers = #tpu.dot_dimension_numbers<[1], [0], [0], [1], [0, 0, 1, 1], [], []>} : vector<64x16xf32>, vector<16x256xf32>, vector<64x256xf32> -> vector<64x256xf32>
    %c0_3 = arith.constant 0 : index
    %c0_4 = arith.constant 0 : index
    %3 = vector.load %arg7[%c0_3, %c0_4] : memref<8x256xf32, #tpu.memory_space<vmem>>, vector<1x256xf32>
    %4 = vector.broadcast %3 : vector<1x256xf32> to vector<64x256xf32>
    %5 = arith.addf %2, %4 : vector<64x256xf32>
    %cst_5 = arith.constant 2.000000e-01 : f32
    %6 = vector.broadcast %cst_5 : f32 to vector<64x256xf32>
    %7 = arith.mulf %6, %5 : vector<64x256xf32>
    %8 = arith.maximumf %5, %7 : vector<64x256xf32>
    %c0_6 = arith.constant 0 : index
    %c0_7 = arith.constant 0 : index
    %9 = vector.load %arg3[%c0_6, %c0_7] : memref<256x128xf32, #tpu.memory_space<vmem>>, vector<256x128xf32>
    %cst_8 = arith.constant dense<0.000000e+00> : vector<64x128xf32>
    %10 = tpu.matmul %8, %9, %cst_8 {dimension_numbers = #tpu.dot_dimension_numbers<[1], [0], [0], [1], [0, 0, 1, 1], [], []>} : vector<64x256xf32>, vector<256x128xf32>, vector<64x128xf32> -> vector<64x128xf32>
    %c1 = arith.constant 1 : index
    %c0_9 = arith.constant 0 : index
    %11 = vector.load %arg7[%c1, %c0_9] : memref<8x256xf32, #tpu.memory_space<vmem>>, vector<1x128xf32>
    %12 = vector.broadcast %11 : vector<1x128xf32> to vector<64x128xf32>
    %13 = arith.addf %10, %12 : vector<64x128xf32>
    %cst_10 = arith.constant 2.000000e-01 : f32
    %14 = vector.broadcast %cst_10 : f32 to vector<64x128xf32>
    %15 = arith.mulf %14, %13 : vector<64x128xf32>
    %16 = arith.maximumf %13, %15 : vector<64x128xf32>
    %c0_11 = arith.constant 0 : index
    %c0_12 = arith.constant 0 : index
    %17 = vector.load %arg4[%c0_11, %c0_12] : memref<128x64xf32, #tpu.memory_space<vmem>>, vector<128x64xf32>
    %cst_13 = arith.constant dense<0.000000e+00> : vector<64x64xf32>
    %18 = tpu.matmul %16, %17, %cst_13 {dimension_numbers = #tpu.dot_dimension_numbers<[1], [0], [0], [1], [0, 0, 1, 1], [], []>} : vector<64x128xf32>, vector<128x64xf32>, vector<64x64xf32> -> vector<64x64xf32>
    %c2 = arith.constant 2 : index
    %c0_14 = arith.constant 0 : index
    %19 = vector.load %arg7[%c2, %c0_14] : memref<8x256xf32, #tpu.memory_space<vmem>>, vector<1x64xf32>
    %20 = vector.broadcast %19 : vector<1x64xf32> to vector<64x64xf32>
    %21 = arith.addf %18, %20 : vector<64x64xf32>
    %cst_15 = arith.constant 2.000000e-01 : f32
    %22 = vector.broadcast %cst_15 : f32 to vector<64x64xf32>
    %23 = arith.mulf %22, %21 : vector<64x64xf32>
    %24 = arith.maximumf %21, %23 : vector<64x64xf32>
    %c0_16 = arith.constant 0 : index
    %c0_17 = arith.constant 0 : index
    %25 = vector.load %arg5[%c0_16, %c0_17] : memref<64x32xf32, #tpu.memory_space<vmem>>, vector<64x32xf32>
    %cst_18 = arith.constant dense<0.000000e+00> : vector<64x32xf32>
    %26 = tpu.matmul %24, %25, %cst_18 {dimension_numbers = #tpu.dot_dimension_numbers<[1], [0], [0], [1], [0, 0, 1, 1], [], []>} : vector<64x64xf32>, vector<64x32xf32>, vector<64x32xf32> -> vector<64x32xf32>
    %c3 = arith.constant 3 : index
    %c0_19 = arith.constant 0 : index
    %27 = vector.load %arg7[%c3, %c0_19] : memref<8x256xf32, #tpu.memory_space<vmem>>, vector<1x32xf32>
    %28 = vector.broadcast %27 : vector<1x32xf32> to vector<64x32xf32>
    %29 = arith.addf %26, %28 : vector<64x32xf32>
    %cst_20 = arith.constant 2.000000e-01 : f32
    %30 = vector.broadcast %cst_20 : f32 to vector<64x32xf32>
    %31 = arith.mulf %30, %29 : vector<64x32xf32>
    %32 = arith.maximumf %29, %31 : vector<64x32xf32>
    %c0_21 = arith.constant 0 : index
    %c0_22 = arith.constant 0 : index
    %33 = vector.load %arg6[%c0_21, %c0_22] : memref<32x2xf32, #tpu.memory_space<vmem>>, vector<32x2xf32>
    %cst_23 = arith.constant dense<0.000000e+00> : vector<64x2xf32>
    %34 = tpu.matmul %32, %33, %cst_23 {dimension_numbers = #tpu.dot_dimension_numbers<[1], [0], [0], [1], [0, 0, 1, 1], [], []>} : vector<64x32xf32>, vector<32x2xf32>, vector<64x2xf32> -> vector<64x2xf32>
    %c4 = arith.constant 4 : index
    %c0_24 = arith.constant 0 : index
    %35 = vector.load %arg7[%c4, %c0_24] : memref<8x256xf32, #tpu.memory_space<vmem>>, vector<1x2xf32>
    %36 = vector.broadcast %35 : vector<1x2xf32> to vector<64x2xf32>
    %37 = arith.addf %34, %36 : vector<64x2xf32>
    %c0_25 = arith.constant 0 : index
    %c0_26 = arith.constant 0 : index
    %38 = vector.load %arg8[%c0_25, %c0_26] : memref<64x2xf32, #tpu.memory_space<vmem>>, vector<64x2xf32>
    tpu.vector_store %arg8[%c0_25, %c0_26], %37 {strides = array<i32>} : memref<64x2xf32, #tpu.memory_space<vmem>>, vector<64x2xf32>,
    return
  }
  func.func @transform_0(%arg0: i32) -> (i32, i32) {
    %c0_i32 = arith.constant 0 : i32
    %c0_i32_0 = arith.constant 0 : i32
    return %arg0, %c0_i32 : i32, i32
  }
  func.func @transform_1(%arg0: i32) -> (i32, i32) {
    %c0_i32 = arith.constant 0 : i32
    %c0_i32_0 = arith.constant 0 : i32
    %c0_i32_1 = arith.constant 0 : i32
    return %c0_i32, %c0_i32_0 : i32, i32
  }
  func.func @transform_2(%arg0: i32) -> (i32, i32) {
    %c0_i32 = arith.constant 0 : i32
    %c0_i32_0 = arith.constant 0 : i32
    %c0_i32_1 = arith.constant 0 : i32
    return %c0_i32, %c0_i32_0 : i32, i32
  }
  func.func @transform_3(%arg0: i32) -> (i32, i32) {
    %c0_i32 = arith.constant 0 : i32
    %c0_i32_0 = arith.constant 0 : i32
    %c0_i32_1 = arith.constant 0 : i32
    return %c0_i32, %c0_i32_0 : i32, i32
  }
  func.func @transform_4(%arg0: i32) -> (i32, i32) {
    %c0_i32 = arith.constant 0 : i32
    %c0_i32_0 = arith.constant 0 : i32
    %c0_i32_1 = arith.constant 0 : i32
    return %c0_i32, %c0_i32_0 : i32, i32
  }
  func.func @transform_5(%arg0: i32) -> (i32, i32) {
    %c0_i32 = arith.constant 0 : i32
    %c0_i32_0 = arith.constant 0 : i32
    %c0_i32_1 = arith.constant 0 : i32
    return %c0_i32, %c0_i32_0 : i32, i32
  }
  func.func @transform_6(%arg0: i32) -> (i32, i32) {
    %c0_i32 = arith.constant 0 : i32
    %c0_i32_0 = arith.constant 0 : i32
    %c0_i32_1 = arith.constant 0 : i32
    return %c0_i32, %c0_i32_0 : i32, i32
  }
  func.func @transform_7(%arg0: i32) -> (i32, i32) {
    %c0_i32 = arith.constant 0 : i32
    %c0_i32_0 = arith.constant 0 : i32
    return %arg0, %c0_i32 : i32, i32
  }
}

</mosaic_0001>

<llo_original>
// kernel: tpu_custom_call.1
$region0: #{tpu_custom_call.1}
  #allocation0 [shape = 'u32[]', space=smem, size = 0x4, offset = 0x4, fixed_abs, tag = 'smem constant byte address 0x4 - core index']
  #allocation1 [shape = 'u32[144,128]{1,0:T(1,128)}', space=vmem, size = 0x12000, scoped, tag = 'internal scratch']
  %s0 = inlined_call_operand.vmem [shape: f32[64,16], index: 0, kind: input, shape index: {}]
  %s1 = inlined_call_operand.vmem [shape: f32[16,256], index: 1, kind: input, shape index: {}]
  %s2 = inlined_call_operand.vmem [shape: f32[256,128], index: 2, kind: input, shape index: {}]
  %s3 = inlined_call_operand.vmem [shape: f32[128,64], index: 3, kind: input, shape index: {}]
  %s4 = inlined_call_operand.vmem [shape: f32[64,32], index: 4, kind: input, shape index: {}]
  %s5 = inlined_call_operand.vmem [shape: f32[32,2], index: 5, kind: input, shape index: {}]
  %s6 = inlined_call_operand.vmem [shape: f32[8,256], index: 6, kind: input, shape index: {}]
  %s7 = inlined_call_operand.vmem [shape: f32[64,2], index: 7, kind: output, shape index: {}]
  %s8 = sld [smem:[#allocation0]]
  $region38: #{tpu_custom_call.1} parent=0
    _
  %s10 = ssub.s32 1, %s8
  %s11 = scalar_select 0, %s10, %s8
  // Predicated region
  $region2: #{tpu_custom_call.1} parent=0 // pred_check
    _
  $region3: #{tpu_custom_call.1} parent=0 // pred_check_branch
    %13 = sbr.rel (0) target = $region5
  $region4: #{tpu_custom_call.1} parent=0 // pred_region
    _
  $region5: #{tpu_custom_call.1} parent=0 // pred_fallthru
    _
  // Predicated region
  $region6: #{tpu_custom_call.1} parent=0 // pred_check
    _
  $region7: #{tpu_custom_call.1} parent=0 // pred_check_branch
    %15 = sbr.rel (0) target = $region9
  $region8: #{tpu_custom_call.1} parent=0 // pred_region
    _
  $region9: #{tpu_custom_call.1} parent=0 // pred_fallthru
    _
  // Predicated region
  $region10: #{tpu_custom_call.1} parent=0 // pred_check
    _
  $region11: #{tpu_custom_call.1} parent=0 // pred_check_branch
    %17 = sbr.rel (0) target = $region13
  $region12: #{tpu_custom_call.1} parent=0 // pred_region
    _
  $region13: #{tpu_custom_call.1} parent=0 // pred_fallthru
    _
  // Predicated region
  $region14: #{tpu_custom_call.1} parent=0 // pred_check
    _
  $region15: #{tpu_custom_call.1} parent=0 // pred_check_branch
    %19 = sbr.rel (0) target = $region17
  $region16: #{tpu_custom_call.1} parent=0 // pred_region
    _
  $region17: #{tpu_custom_call.1} parent=0 // pred_fallthru
    _
  // Predicated region
  $region18: #{tpu_custom_call.1} parent=0 // pred_check
    _
  $region19: #{tpu_custom_call.1} parent=0 // pred_check_branch
    %21 = sbr.rel (0) target = $region21
  $region20: #{tpu_custom_call.1} parent=0 // pred_region
    _
  $region21: #{tpu_custom_call.1} parent=0 // pred_fallthru
    _
  // Predicated region
  $region22: #{tpu_custom_call.1} parent=0 // pred_check
    _
  $region23: #{tpu_custom_call.1} parent=0 // pred_check_branch
    %23 = sbr.rel (0) target = $region25
  $region24: #{tpu_custom_call.1} parent=0 // pred_region
    _
  $region25: #{tpu_custom_call.1} parent=0 // pred_fallthru
    _
  // Predicated region
  $region26: #{tpu_custom_call.1} parent=0 // pred_check
    _
  $region27: #{tpu_custom_call.1} parent=0 // pred_check_branch
    %25 = sbr.rel (0) target = $region29
  $region28: #{tpu_custom_call.1} parent=0 // pred_region
    _
  $region29: #{tpu_custom_call.1} parent=0 // pred_fallthru
    _
  %v26 = vld [vmem:[%s0] sm:$0xff]
  %v27 = vld [vmem:[%s0 + $0x8] sm:$0xff]
  %v28 = vld [vmem:[%s0 + $0x10] sm:$0xff]
  %v29 = vld [vmem:[%s0 + $0x18] sm:$0xff]
  %v30 = vld [vmem:[%s0 + $0x20] sm:$0xff]
  %v31 = vld [vmem:[%s0 + $0x28] sm:$0xff]
  %v32 = vld [vmem:[%s0 + $0x30] sm:$0xff]
  %v33 = vld [vmem:[%s0 + $0x38] sm:$0xff]
  %v34 = vld [vmem:[%s1] sm:$0xff]
  %v35 = vld [vmem:[%s1 + $0x8] sm:$0xff]
  %v36 = vld [vmem:[%s1 + $0x10] sm:$0xff]
  %v37 = vld [vmem:[%s1 + $0x18] sm:$0xff]
  %v38 = vld [vmem:[%s6] ss:$8 sm:$0x3]
  %v40 = vlaneseq
  %v41 = vshrl.u32 %v40, 7
  %v42 = vsub.s32 0, %v41
  %v43 = vrot.slane %v38, %v42
  %v44 = vlaneseq
  %v45 = vshrl.u32 %v44, 7
  %v46 = vsub.s32 1, %v45
  %v47 = vrot.slane %v38, %v46
  %vm50 = vcmask 130048
  %v52 = vsel %vm50, %v26, 0
  %v55 = vsel %vm50, %v27, 0
  %v58 = vsel %vm50, %v28, 0
  %v61 = vsel %vm50, %v29, 0
  %v64 = vsel %vm50, %v30, 0
  %v67 = vsel %vm50, %v31, 0
  %v70 = vsel %vm50, %v32, 0
  %v73 = vsel %vm50, %v33, 0
  %75 = vmatprep.subr.mxu0 0.0
  %76 = vmatpush1.msra.mxu0 0.0
  %77 = vmatprep.subr.mxu0 0.0
  %78 = vmatpush1.msra.mxu0 0.0
  %79 = vmatprep.subr.mxu0 0.0
  %80 = vmatpush1.msra.mxu0 0.0
  %81 = vmatprep.subr.mxu0 0.0
  %82 = vmatpush1.msra.mxu0 0.0
  %83 = vmatprep.subr.mxu0 0.0
  %84 = vmatpush1.msra.mxu0 0.0
  %85 = vmatprep.subr.mxu0 0.0
  %86 = vmatpush1.msra.mxu0 0.0
  %87 = vmatprep.subr.mxu0 0.0
  %88 = vmatpush1.msra.mxu0 0.0
  %89 = vmatprep.subr.mxu0 0.0
  %90 = vmatpush1.msra.mxu0 0.0
  %91 = vmatprep.subr.mxu0 0.0
  %92 = vmatpush1.msra.mxu0 0.0
  %93 = vmatprep.subr.mxu0 0.0
  %94 = vmatpush1.msra.mxu0 0.0
  %95 = vmatprep.subr.mxu0 0.0
  %96 = vmatpush1.msra.mxu0 0.0
  %97 = vmatprep.subr.mxu0 0.0
  %98 = vmatpush1.msra.mxu0 0.0
  %99 = vmatprep.subr.mxu0 0.0
  %100 = vmatpush1.msra.mxu0 0.0
  %101 = vmatprep.subr.mxu0 0.0
  %102 = vmatpush1.msra.mxu0 0.0
  %103 = vmatprep.subr.mxu0 %v37
  %104 = vmatpush1.msra.mxu0 %v36
  %105 = vmatprep.subr.mxu0 %v35
  %106 = vmatpush1.msra.mxu0 %v34
  %107 = vmatprep.subr.mxu0 0.0
  %108 = vmatpush2.msra.mxu0 0.0
  %109 = vmatprep.subr.mxu0 0.0
  %110 = vmatpush2.msra.mxu0 0.0
  %111 = vmatprep.subr.mxu0 0.0
  %112 = vmatpush2.msra.mxu0 0.0
  %113 = vmatprep.subr.mxu0 0.0
  %114 = vmatpush2.msra.mxu0 0.0
  %115 = vmatprep.subr.mxu0 0.0
  %116 = vmatpush2.msra.mxu0 0.0
  %117 = vmatprep.subr.mxu0 0.0
  %118 = vmatpush2.msra.mxu0 0.0
  %119 = vmatprep.subr.mxu0 0.0
  %120 = vmatpush2.msra.mxu0 0.0
  %121 = vmatprep.subr.mxu0 0.0
  %122 = vmatpush2.msra.mxu0 0.0
  %123 = vmatprep.subr.mxu0 0.0
  %124 = vmatpush2.msra.mxu0 0.0
  %125 = vmatprep.subr.mxu0 0.0
  %126 = vmatpush2.msra.mxu0 0.0
  %127 = vmatprep.subr.mxu0 0.0
  %128 = vmatpush2.msra.mxu0 0.0
  %129 = vmatprep.subr.mxu0 0.0
  %130 = vmatpush2.msra.mxu0 0.0
  %131 = vmatprep.subr.mxu0 0.0
  %132 = vmatpush2.msra.mxu0 0.0
  %133 = vmatprep.subr.mxu0 0.0
  %134 = vmatpush2.msra.mxu0 0.0
  %135 = vmatprep.subr.mxu0 0.0
  %136 = vmatpush2.msra.mxu0 0.0
  %137 = vmatprep.subr.mxu0 0.0
  %138 = vmatpush2.msra.mxu0 0.0
  %139 = vmatprep.mubr.f32.mxu0 0.0
  %140 = vmatmul.mubr.f32.gmra.mxu0 %v52
  %v141 = vpop.f32.mrf.mxu0
  %v142 = vadd.f32 %v43, %v141
  %v143 = vpop.f32.mrf.mxu0
  %v144 = vadd.f32 %v47, %v143
  %145 = vmatprep.mubr.f32.mxu0 0.0
  %146 = vmatmul.mubr.f32.gmra.mxu0 %v55
  %v147 = vpop.f32.mrf.mxu0
  %v148 = vadd.f32 %v43, %v147
  %v149 = vpop.f32.mrf.mxu0
  %v150 = vadd.f32 %v47, %v149
  %151 = vmatprep.mubr.f32.mxu0 0.0
  %152 = vmatmul.mubr.f32.gmra.mxu0 %v58
  %v153 = vpop.f32.mrf.mxu0
  %v154 = vadd.f32 %v43, %v153
  %v155 = vpop.f32.mrf.mxu0
  %v156 = vadd.f32 %v47, %v155
  %157 = vmatprep.mubr.f32.mxu0 0.0
  %158 = vmatmul.mubr.f32.gmra.mxu0 %v61
  %v159 = vpop.f32.mrf.mxu0
  %v160 = vadd.f32 %v43, %v159
  %v161 = vpop.f32.mrf.mxu0
  %v162 = vadd.f32 %v47, %v161
  %163 = vmatprep.mubr.f32.mxu0 0.0
  %164 = vmatmul.mubr.f32.gmra.mxu0 %v64
  %v165 = vpop.f32.mrf.mxu0
  %v166 = vadd.f32 %v43, %v165
  %v167 = vpop.f32.mrf.mxu0
  %v168 = vadd.f32 %v47, %v167
  %169 = vmatprep.mubr.f32.mxu0 0.0
  %170 = vmatmul.mubr.f32.gmra.mxu0 %v67
  %v171 = vpop.f32.mrf.mxu0
  %v172 = vadd.f32 %v43, %v171
  %v173 = vpop.f32.mrf.mxu0
  %v174 = vadd.f32 %v47, %v173
  %175 = vmatprep.mubr.f32.mxu0 0.0
  %176 = vmatmul.mubr.f32.gmra.mxu0 %v70
  %v177 = vpop.f32.mrf.mxu0
  %v178 = vadd.f32 %v43, %v177
  %v179 = vpop.f32.mrf.mxu0
  %v180 = vadd.f32 %v47, %v179
  %181 = vmatprep.mubr.f32.mxu0 0.0
  %182 = vmatmul.mubr.f32.gmra.mxu0 %v73
  %v183 = vpop.f32.mrf.mxu0
  %v184 = vadd.f32 %v43, %v183
  %v185 = vpop.f32.mrf.mxu0
  %v186 = vadd.f32 %v47, %v185
  %187 = vdwg.mxu0
  %v188 = vmul.f32 %v142, 0.2
  %v189 = vmul.f32 %v144, 0.2
  %v190 = vmul.f32 %v148, 0.2
  %v191 = vmul.f32 %v150, 0.2
  %v192 = vmul.f32 %v154, 0.2
  %v193 = vmul.f32 %v156, 0.2
  %v194 = vmul.f32 %v160, 0.2
  %v195 = vmul.f32 %v162, 0.2
  %v196 = vmul.f32 %v166, 0.2
  %v197 = vmul.f32 %v168, 0.2
  %v198 = vmul.f32 %v172, 0.2
  %v199 = vmul.f32 %v174, 0.2
  %v200 = vmul.f32 %v178, 0.2
  %v201 = vmul.f32 %v180, 0.2
  %v202 = vmul.f32 %v184, 0.2
  %v203 = vmul.f32 %v186, 0.2
  %v204 = vmax.f32 %v142, %v188
  %v205 = vmax.f32 %v144, %v189
  %v206 = vmax.f32 %v148, %v190
  %v207 = vmax.f32 %v150, %v191
  %v208 = vmax.f32 %v154, %v192
  %v209 = vmax.f32 %v156, %v193
  %v210 = vmax.f32 %v160, %v194
  %v211 = vmax.f32 %v162, %v195
  %v212 = vmax.f32 %v166, %v196
  %v213 = vmax.f32 %v168, %v197
  %v214 = vmax.f32 %v172, %v198
  %v215 = vmax.f32 %v174, %v199
  %v216 = vmax.f32 %v178, %v200
  %v217 = vmax.f32 %v180, %v201
  %v218 = vmax.f32 %v184, %v202
  %v219 = vmax.f32 %v186, %v203
  %v220 = vld [vmem:[%s2] sm:$0xff]
  %v221 = vld [vmem:[%s2 + $0x8] sm:$0xff]
  %v222 = vld [vmem:[%s2 + $0x10] sm:$0xff]
  %v223 = vld [vmem:[%s2 + $0x18] sm:$0xff]
  %v224 = vld [vmem:[%s2 + $0x20] sm:$0xff]
  %v225 = vld [vmem:[%s2 + $0x28] sm:$0xff]
  %v226 = vld [vmem:[%s2 + $0x30] sm:$0xff]
  %v227 = vld [vmem:[%s2 + $0x38] sm:$0xff]
  %v228 = vld [vmem:[%s2 + $0x40] sm:$0xff]
  %v229 = vld [vmem:[%s2 + $0x48] sm:$0xff]
  %v230 = vld [vmem:[%s2 + $0x50] sm:$0xff]
  %v231 = vld [vmem:[%s2 + $0x58] sm:$0xff]
  %v232 = vld [vmem:[%s2 + $0x60] sm:$0xff]
  %v233 = vld [vmem:[%s2 + $0x68] sm:$0xff]
  %v234 = vld [vmem:[%s2 + $0x70] sm:$0xff]
  %v235 = vld [vmem:[%s2 + $0x78] sm:$0xff]
  %v236 = vld [vmem:[%s2 + $0x80] sm:$0xff]
  %v237 = vld [vmem:[%s2 + $0x88] sm:$0xff]
  %v238 = vld [vmem:[%s2 + $0x90] sm:$0xff]
  %v239 = vld [vmem:[%s2 + $0x98] sm:$0xff]
  %v240 = vld [vmem:[%s2 + $0xa0] sm:$0xff]
  %v241 = vld [vmem:[%s2 + $0xa8] sm:$0xff]
  %v242 = vld [vmem:[%s2 + $0xb0] sm:$0xff]
  %v243 = vld [vmem:[%s2 + $0xb8] sm:$0xff]
  %v244 = vld [vmem:[%s2 + $0xc0] sm:$0xff]
  %v245 = vld [vmem:[%s2 + $0xc8] sm:$0xff]
  %v246 = vld [vmem:[%s2 + $0xd0] sm:$0xff]
  %v247 = vld [vmem:[%s2 + $0xd8] sm:$0xff]
  %v248 = vld [vmem:[%s2 + $0xe0] sm:$0xff]
  %v249 = vld [vmem:[%s2 + $0xe8] sm:$0xff]
  %v250 = vld [vmem:[%s2 + $0xf0] sm:$0xff]
  %v251 = vld [vmem:[%s2 + $0xf8] sm:$0xff]
  %v252 = vld [vmem:[%s6 + $0x1] ss:$0 sm:$0xff]
  %253 = vmatprep.subr.mxu0 0.0
  %254 = vmatpush1.msra.mxu0 %v235
  %255 = vmatprep.subr.mxu0 0.0
  %256 = vmatpush1.msra.mxu0 %v234
  %257 = vmatprep.subr.mxu0 0.0
  %258 = vmatpush1.msra.mxu0 %v233
  %259 = vmatprep.subr.mxu0 0.0
  %260 = vmatpush1.msra.mxu0 %v232
  %261 = vmatprep.subr.mxu0 0.0
  %262 = vmatpush1.msra.mxu0 %v231
  %263 = vmatprep.subr.mxu0 0.0
  %264 = vmatpush1.msra.mxu0 %v230
  %265 = vmatprep.subr.mxu0 0.0
  %266 = vmatpush1.msra.mxu0 %v229
  %267 = vmatprep.subr.mxu0 0.0
  %268 = vmatpush1.msra.mxu0 %v228
  %269 = vmatprep.subr.mxu0 0.0
  %270 = vmatpush1.msra.mxu0 %v227
  %271 = vmatprep.subr.mxu0 0.0
  %272 = vmatpush1.msra.mxu0 %v226
  %273 = vmatprep.subr.mxu0 0.0
  %274 = vmatpush1.msra.mxu0 %v225
  %275 = vmatprep.subr.mxu0 0.0
  %276 = vmatpush1.msra.mxu0 %v224
  %277 = vmatprep.subr.mxu0 0.0
  %278 = vmatpush1.msra.mxu0 %v223
  %279 = vmatprep.subr.mxu0 0.0
  %280 = vmatpush1.msra.mxu0 %v222
  %281 = vmatprep.subr.mxu0 0.0
  %282 = vmatpush1.msra.mxu0 %v221
  %283 = vmatprep.subr.mxu0 0.0
  %284 = vmatpush1.msra.mxu0 %v220
  %285 = vmatprep.subr.mxu0 0.0
  %286 = vmatpush2.msra.mxu0 %v251
  %287 = vmatprep.subr.mxu0 0.0
  %288 = vmatpush2.msra.mxu0 %v250
  %289 = vmatprep.subr.mxu0 0.0
  %290 = vmatpush2.msra.mxu0 %v249
  %291 = vmatprep.subr.mxu0 0.0
  %292 = vmatpush2.msra.mxu0 %v248
  %293 = vmatprep.subr.mxu0 0.0
  %294 = vmatpush2.msra.mxu0 %v247
  %295 = vmatprep.subr.mxu0 0.0
  %296 = vmatpush2.msra.mxu0 %v246
  %297 = vmatprep.subr.mxu0 0.0
  %298 = vmatpush2.msra.mxu0 %v245
  %299 = vmatprep.subr.mxu0 0.0
  %300 = vmatpush2.msra.mxu0 %v244
  %301 = vmatprep.subr.mxu0 0.0
  %302 = vmatpush2.msra.mxu0 %v243
  %303 = vmatprep.subr.mxu0 0.0
  %304 = vmatpush2.msra.mxu0 %v242
  %305 = vmatprep.subr.mxu0 0.0
  %306 = vmatpush2.msra.mxu0 %v241
  %307 = vmatprep.subr.mxu0 0.0
  %308 = vmatpush2.msra.mxu0 %v240
  %309 = vmatprep.subr.mxu0 0.0
  %310 = vmatpush2.msra.mxu0 %v239
  %311 = vmatprep.subr.mxu0 0.0
  %312 = vmatpush2.msra.mxu0 %v238
  %313 = vmatprep.subr.mxu0 0.0
  %314 = vmatpush2.msra.mxu0 %v237
  %315 = vmatprep.subr.mxu0 0.0
  %316 = vmatpush2.msra.mxu0 %v236
  %317 = vmatprep.mubr.f32.mxu0 %v205
  %318 = vmatmul.mubr.f32.gmra.mxu0 %v204
  %v319 = vpop.f32.mrf.mxu0
  %v320 = vadd.f32 %v252, %v319
  %v321 = vpop.f32.mrf.mxu0
  %322 = vmatprep.mubr.f32.mxu0 %v207
  %323 = vmatmul.mubr.f32.gmra.mxu0 %v206
  %v324 = vpop.f32.mrf.mxu0
  %v325 = vadd.f32 %v252, %v324
  %v326 = vpop.f32.mrf.mxu0
  %327 = vmatprep.mubr.f32.mxu0 %v209
  %328 = vmatmul.mubr.f32.gmra.mxu0 %v208
  %v329 = vpop.f32.mrf.mxu0
  %v330 = vadd.f32 %v252, %v329
  %v331 = vpop.f32.mrf.mxu0
  %332 = vmatprep.mubr.f32.mxu0 %v211
  %333 = vmatmul.mubr.f32.gmra.mxu0 %v210
  %v334 = vpop.f32.mrf.mxu0
  %v335 = vadd.f32 %v252, %v334
  %v336 = vpop.f32.mrf.mxu0
  %337 = vmatprep.mubr.f32.mxu0 %v213
  %338 = vmatmul.mubr.f32.gmra.mxu0 %v212
  %v339 = vpop.f32.mrf.mxu0
  %v340 = vadd.f32 %v252, %v339
  %v341 = vpop.f32.mrf.mxu0
  %342 = vmatprep.mubr.f32.mxu0 %v215
  %343 = vmatmul.mubr.f32.gmra.mxu0 %v214
  %v344 = vpop.f32.mrf.mxu0
  %v345 = vadd.f32 %v252, %v344
  %v346 = vpop.f32.mrf.mxu0
  %347 = vmatprep.mubr.f32.mxu0 %v217
  %348 = vmatmul.mubr.f32.gmra.mxu0 %v216
  %v349 = vpop.f32.mrf.mxu0
  %v350 = vadd.f32 %v252, %v349
  %v351 = vpop.f32.mrf.mxu0
  %352 = vmatprep.mubr.f32.mxu0 %v219
  %353 = vmatmul.mubr.f32.gmra.mxu0 %v218
  %v354 = vpop.f32.mrf.mxu0
  %v355 = vadd.f32 %v252, %v354
  %v356 = vpop.f32.mrf.mxu0
  %357 = vdwg.mxu0
  %v358 = vmul.f32 %v320, 0.2
  %v359 = vmul.f32 %v325, 0.2
  %v360 = vmul.f32 %v330, 0.2
  %v361 = vmul.f32 %v335, 0.2
  %v362 = vmul.f32 %v340, 0.2
  %v363 = vmul.f32 %v345, 0.2
  %v364 = vmul.f32 %v350, 0.2
  %v365 = vmul.f32 %v355, 0.2
  %v366 = vmax.f32 %v320, %v358
  %v367 = vmax.f32 %v325, %v359
  %v368 = vmax.f32 %v330, %v360
  %v369 = vmax.f32 %v335, %v361
  %v370 = vmax.f32 %v340, %v362
  %v371 = vmax.f32 %v345, %v363
  %v372 = vmax.f32 %v350, %v364
  %v373 = vmax.f32 %v355, %v365
  %v374 = vld [vmem:[%s3] sm:$0xff]
  %v375 = vld [vmem:[%s3 + $0x8] sm:$0xff]
  %v376 = vld [vmem:[%s3 + $0x10] sm:$0xff]
  %v377 = vld [vmem:[%s3 + $0x18] sm:$0xff]
  %v378 = vld [vmem:[%s3 + $0x20] sm:$0xff]
  %v379 = vld [vmem:[%s3 + $0x28] sm:$0xff]
  %v380 = vld [vmem:[%s3 + $0x30] sm:$0xff]
  %v381 = vld [vmem:[%s3 + $0x38] sm:$0xff]
  %v382 = vld [vmem:[%s3 + $0x40] sm:$0xff]
  %v383 = vld [vmem:[%s3 + $0x48] sm:$0xff]
  %v384 = vld [vmem:[%s3 + $0x50] sm:$0xff]
  %v385 = vld [vmem:[%s3 + $0x58] sm:$0xff]
  %v386 = vld [vmem:[%s3 + $0x60] sm:$0xff]
  %v387 = vld [vmem:[%s3 + $0x68] sm:$0xff]
  %v388 = vld [vmem:[%s3 + $0x70] sm:$0xff]
  %v389 = vld [vmem:[%s3 + $0x78] sm:$0xff]
  %v390 = vld [vmem:[%s6 + $0x2] ss:$0 sm:$0xff]
  %391 = vmatprep.subr.mxu0 0.0
  %392 = vmatpush1.msra.mxu0 %v389
  %393 = vmatprep.subr.mxu0 0.0
  %394 = vmatpush1.msra.mxu0 %v388
  %395 = vmatprep.subr.mxu0 0.0
  %396 = vmatpush1.msra.mxu0 %v387
  %397 = vmatprep.subr.mxu0 0.0
  %398 = vmatpush1.msra.mxu0 %v386
  %399 = vmatprep.subr.mxu0 0.0
  %400 = vmatpush1.msra.mxu0 %v385
  %401 = vmatprep.subr.mxu0 0.0
  %402 = vmatpush1.msra.mxu0 %v384
  %403 = vmatprep.subr.mxu0 0.0
  %404 = vmatpush1.msra.mxu0 %v383
  %405 = vmatprep.subr.mxu0 0.0
  %406 = vmatpush1.msra.mxu0 %v382
  %407 = vmatprep.subr.mxu0 0.0
  %408 = vmatpush1.msra.mxu0 %v381
  %409 = vmatprep.subr.mxu0 0.0
  %410 = vmatpush1.msra.mxu0 %v380
  %411 = vmatprep.subr.mxu0 0.0
  %412 = vmatpush1.msra.mxu0 %v379
  %413 = vmatprep.subr.mxu0 0.0
  %414 = vmatpush1.msra.mxu0 %v378
  %415 = vmatprep.subr.mxu0 0.0
  %416 = vmatpush1.msra.mxu0 %v377
  %417 = vmatprep.subr.mxu0 0.0
  %418 = vmatpush1.msra.mxu0 %v376
  %419 = vmatprep.subr.mxu0 0.0
  %420 = vmatpush1.msra.mxu0 %v375
  %421 = vmatprep.subr.mxu0 0.0
  %422 = vmatpush1.msra.mxu0 %v374
  %423 = vmatprep.subr.mxu0 0.0
  %424 = vmatpush2.msra.mxu0 0.0
  %425 = vmatprep.subr.mxu0 0.0
  %426 = vmatpush2.msra.mxu0 0.0
  %427 = vmatprep.subr.mxu0 0.0
  %428 = vmatpush2.msra.mxu0 0.0
  %429 = vmatprep.subr.mxu0 0.0
  %430 = vmatpush2.msra.mxu0 0.0
  %431 = vmatprep.subr.mxu0 0.0
  %432 = vmatpush2.msra.mxu0 0.0
  %433 = vmatprep.subr.mxu0 0.0
  %434 = vmatpush2.msra.mxu0 0.0
  %435 = vmatprep.subr.mxu0 0.0
  %436 = vmatpush2.msra.mxu0 0.0
  %437 = vmatprep.subr.mxu0 0.0
  %438 = vmatpush2.msra.mxu0 0.0
  %439 = vmatprep.subr.mxu0 0.0
  %440 = vmatpush2.msra.mxu0 0.0
  %441 = vmatprep.subr.mxu0 0.0
  %442 = vmatpush2.msra.mxu0 0.0
  %443 = vmatprep.subr.mxu0 0.0
  %444 = vmatpush2.msra.mxu0 0.0
  %445 = vmatprep.subr.mxu0 0.0
  %446 = vmatpush2.msra.mxu0 0.0
  %447 = vmatprep.subr.mxu0 0.0
  %448 = vmatpush2.msra.mxu0 0.0
  %449 = vmatprep.subr.mxu0 0.0
  %450 = vmatpush2.msra.mxu0 0.0
  %451 = vmatprep.subr.mxu0 0.0
  %452 = vmatpush2.msra.mxu0 0.0
  %453 = vmatprep.subr.mxu0 0.0
  %454 = vmatpush2.msra.mxu0 0.0
  %455 = vmatprep.mubr.f32.mxu0 0.0
  %456 = vmatmul.mubr.f32.gmra.mxu0 %v366
  %v457 = vpop.f32.mrf.mxu0
  %v458 = vadd.f32 %v390, %v457
  %v459 = vpop.f32.mrf.mxu0
  %460 = vmatprep.mubr.f32.mxu0 0.0
  %461 = vmatmul.mubr.f32.gmra.mxu0 %v367
  %v462 = vpop.f32.mrf.mxu0
  %v463 = vadd.f32 %v390, %v462
  %v464 = vpop.f32.mrf.mxu0
  %465 = vmatprep.mubr.f32.mxu0 0.0
  %466 = vmatmul.mubr.f32.gmra.mxu0 %v368
  %v467 = vpop.f32.mrf.mxu0
  %v468 = vadd.f32 %v390, %v467
  %v469 = vpop.f32.mrf.mxu0
  %470 = vmatprep.mubr.f32.mxu0 0.0
  %471 = vmatmul.mubr.f32.gmra.mxu0 %v369
  %v472 = vpop.f32.mrf.mxu0
  %v473 = vadd.f32 %v390, %v472
  %v474 = vpop.f32.mrf.mxu0
  %475 = vmatprep.mubr.f32.mxu0 0.0
  %476 = vmatmul.mubr.f32.gmra.mxu0 %v370
  %v477 = vpop.f32.mrf.mxu0
  %v478 = vadd.f32 %v390, %v477
  %v479 = vpop.f32.mrf.mxu0
  %480 = vmatprep.mubr.f32.mxu0 0.0
  %481 = vmatmul.mubr.f32.gmra.mxu0 %v371
  %v482 = vpop.f32.mrf.mxu0
  %v483 = vadd.f32 %v390, %v482
  %v484 = vpop.f32.mrf.mxu0
  %485 = vmatprep.mubr.f32.mxu0 0.0
  %486 = vmatmul.mubr.f32.gmra.mxu0 %v372
  %v487 = vpop.f32.mrf.mxu0
  %v488 = vadd.f32 %v390, %v487
  %v489 = vpop.f32.mrf.mxu0
  %490 = vmatprep.mubr.f32.mxu0 0.0
  %491 = vmatmul.mubr.f32.gmra.mxu0 %v373
  %v492 = vpop.f32.mrf.mxu0
  %v493 = vadd.f32 %v390, %v492
  %v494 = vpop.f32.mrf.mxu0
  %495 = vdwg.mxu0
  %v496 = vmul.f32 %v458, 0.2
  %v497 = vmul.f32 %v463, 0.2
  %v498 = vmul.f32 %v468, 0.2
  %v499 = vmul.f32 %v473, 0.2
  %v500 = vmul.f32 %v478, 0.2
  %v501 = vmul.f32 %v483, 0.2
  %v502 = vmul.f32 %v488, 0.2
  %v503 = vmul.f32 %v493, 0.2
  %v504 = vmax.f32 %v458, %v496
  %v505 = vmax.f32 %v463, %v497
  %v506 = vmax.f32 %v468, %v498
  %v507 = vmax.f32 %v473, %v499
  %v508 = vmax.f32 %v478, %v500
  %v509 = vmax.f32 %v483, %v501
  %v510 = vmax.f32 %v488, %v502
  %v511 = vmax.f32 %v493, %v503
  %v512 = vld [vmem:[%s4] sm:$0xff]
  %v513 = vld [vmem:[%s4 + $0x8] sm:$0xff]
  %v514 = vld [vmem:[%s4 + $0x10] sm:$0xff]
  %v515 = vld [vmem:[%s4 + $0x18] sm:$0xff]
  %v516 = vld [vmem:[%s4 + $0x20] sm:$0xff]
  %v517 = vld [vmem:[%s4 + $0x28] sm:$0xff]
  %v518 = vld [vmem:[%s4 + $0x30] sm:$0xff]
  %v519 = vld [vmem:[%s4 + $0x38] sm:$0xff]
  %v520 = vld [vmem:[%s6 + $0x3] ss:$0 sm:$0xff]
  %vm521 = vcmask 523264
  %v523 = vsel %vm521, %v504, 0
  %v526 = vsel %vm521, %v505, 0
  %v529 = vsel %vm521, %v506, 0
  %v532 = vsel %vm521, %v507, 0
  %v535 = vsel %vm521, %v508, 0
  %v538 = vsel %vm521, %v509, 0
  %v541 = vsel %vm521, %v510, 0
  %v544 = vsel %vm521, %v511, 0
  %546 = vmatprep.subr.mxu0 0.0
  %547 = vmatpush1.msra.mxu0 0.0
  %548 = vmatprep.subr.mxu0 0.0
  %549 = vmatpush1.msra.mxu0 0.0
  %550 = vmatprep.subr.mxu0 0.0
  %551 = vmatpush1.msra.mxu0 0.0
  %552 = vmatprep.subr.mxu0 0.0
  %553 = vmatpush1.msra.mxu0 0.0
  %554 = vmatprep.subr.mxu0 0.0
  %555 = vmatpush1.msra.mxu0 0.0
  %556 = vmatprep.subr.mxu0 0.0
  %557 = vmatpush1.msra.mxu0 0.0
  %558 = vmatprep.subr.mxu0 0.0
  %559 = vmatpush1.msra.mxu0 0.0
  %560 = vmatprep.subr.mxu0 0.0
  %561 = vmatpush1.msra.mxu0 0.0
  %562 = vmatprep.subr.mxu0 0.0
  %563 = vmatpush1.msra.mxu0 %v519
  %564 = vmatprep.subr.mxu0 0.0
  %565 = vmatpush1.msra.mxu0 %v518
  %566 = vmatprep.subr.mxu0 0.0
  %567 = vmatpush1.msra.mxu0 %v517
  %568 = vmatprep.subr.mxu0 0.0
  %569 = vmatpush1.msra.mxu0 %v516
  %570 = vmatprep.subr.mxu0 0.0
  %571 = vmatpush1.msra.mxu0 %v515
  %572 = vmatprep.subr.mxu0 0.0
  %573 = vmatpush1.msra.mxu0 %v514
  %574 = vmatprep.subr.mxu0 0.0
  %575 = vmatpush1.msra.mxu0 %v513
  %576 = vmatprep.subr.mxu0 0.0
  %577 = vmatpush1.msra.mxu0 %v512
  %578 = vmatprep.subr.mxu0 0.0
  %579 = vmatpush2.msra.mxu0 0.0
  %580 = vmatprep.subr.mxu0 0.0
  %581 = vmatpush2.msra.mxu0 0.0
  %582 = vmatprep.subr.mxu0 0.0
  %583 = vmatpush2.msra.mxu0 0.0
  %584 = vmatprep.subr.mxu0 0.0
  %585 = vmatpush2.msra.mxu0 0.0
  %586 = vmatprep.subr.mxu0 0.0
  %587 = vmatpush2.msra.mxu0 0.0
  %588 = vmatprep.subr.mxu0 0.0
  %589 = vmatpush2.msra.mxu0 0.0
  %590 = vmatprep.subr.mxu0 0.0
  %591 = vmatpush2.msra.mxu0 0.0
  %592 = vmatprep.subr.mxu0 0.0
  %593 = vmatpush2.msra.mxu0 0.0
  %594 = vmatprep.subr.mxu0 0.0
  %595 = vmatpush2.msra.mxu0 0.0
  %596 = vmatprep.subr.mxu0 0.0
  %597 = vmatpush2.msra.mxu0 0.0
  %598 = vmatprep.subr.mxu0 0.0
  %599 = vmatpush2.msra.mxu0 0.0
  %600 = vmatprep.subr.mxu0 0.0
  %601 = vmatpush2.msra.mxu0 0.0
  %602 = vmatprep.subr.mxu0 0.0
  %603 = vmatpush2.msra.mxu0 0.0
  %604 = vmatprep.subr.mxu0 0.0
  %605 = vmatpush2.msra.mxu0 0.0
  %606 = vmatprep.subr.mxu0 0.0
  %607 = vmatpush2.msra.mxu0 0.0
  %608 = vmatprep.subr.mxu0 0.0
  %609 = vmatpush2.msra.mxu0 0.0
  %610 = vmatprep.mubr.f32.mxu0 0.0
  %611 = vmatmul.mubr.f32.gmra.mxu0 %v523
  %v612 = vpop.f32.mrf.mxu0
  %v613 = vadd.f32 %v520, %v612
  %v614 = vpop.f32.mrf.mxu0
  %615 = vmatprep.mubr.f32.mxu0 0.0
  %616 = vmatmul.mubr.f32.gmra.mxu0 %v526
  %v617 = vpop.f32.mrf.mxu0
  %v618 = vadd.f32 %v520, %v617
  %v619 = vpop.f32.mrf.mxu0
  %620 = vmatprep.mubr.f32.mxu0 0.0
  %621 = vmatmul.mubr.f32.gmra.mxu0 %v529
  %v622 = vpop.f32.mrf.mxu0
  %v623 = vadd.f32 %v520, %v622
  %v624 = vpop.f32.mrf.mxu0
  %625 = vmatprep.mubr.f32.mxu0 0.0
  %626 = vmatmul.mubr.f32.gmra.mxu0 %v532
  %v627 = vpop.f32.mrf.mxu0
  %v628 = vadd.f32 %v520, %v627
  %v629 = vpop.f32.mrf.mxu0
  %630 = vmatprep.mubr.f32.mxu0 0.0
  %631 = vmatmul.mubr.f32.gmra.mxu0 %v535
  %v632 = vpop.f32.mrf.mxu0
  %v633 = vadd.f32 %v520, %v632
  %v634 = vpop.f32.mrf.mxu0
  %635 = vmatprep.mubr.f32.mxu0 0.0
  %636 = vmatmul.mubr.f32.gmra.mxu0 %v538
  %v637 = vpop.f32.mrf.mxu0
  %v638 = vadd.f32 %v520, %v637
  %v639 = vpop.f32.mrf.mxu0
  %640 = vmatprep.mubr.f32.mxu0 0.0
  %641 = vmatmul.mubr.f32.gmra.mxu0 %v541
  %v642 = vpop.f32.mrf.mxu0
  %v643 = vadd.f32 %v520, %v642
  %v644 = vpop.f32.mrf.mxu0
  %645 = vmatprep.mubr.f32.mxu0 0.0
  %646 = vmatmul.mubr.f32.gmra.mxu0 %v544
  %v647 = vpop.f32.mrf.mxu0
  %v648 = vadd.f32 %v520, %v647
  %v649 = vpop.f32.mrf.mxu0
  %650 = vdwg.mxu0
  %v651 = vmul.f32 %v613, 0.2
  %v652 = vmul.f32 %v618, 0.2
  %v653 = vmul.f32 %v623, 0.2
  %v654 = vmul.f32 %v628, 0.2
  %v655 = vmul.f32 %v633, 0.2
  %v656 = vmul.f32 %v638, 0.2
  %v657 = vmul.f32 %v643, 0.2
  %v658 = vmul.f32 %v648, 0.2
  %v659 = vmax.f32 %v613, %v651
  %v660 = vmax.f32 %v618, %v652
  %v661 = vmax.f32 %v623, %v653
  %v662 = vmax.f32 %v628, %v654
  %v663 = vmax.f32 %v633, %v655
  %v664 = vmax.f32 %v638, %v656
  %v665 = vmax.f32 %v643, %v657
  %v666 = vmax.f32 %v648, %v658
  %v667 = vld [vmem:[%s5] sm:$0xff]
  %v668 = vld [vmem:[%s5 + $0x8] sm:$0xff]
  %v669 = vld [vmem:[%s5 + $0x10] sm:$0xff]
  %v670 = vld [vmem:[%s5 + $0x18] sm:$0xff]
  %v671 = vld [vmem:[%s6 + $0x4] ss:$0 sm:$0xff]
  %vm672 = vcmask 261120
  %v674 = vsel %vm672, %v659, 0
  %v677 = vsel %vm672, %v660, 0
  %v680 = vsel %vm672, %v661, 0
  %v683 = vsel %vm672, %v662, 0
  %v686 = vsel %vm672, %v663, 0
  %v689 = vsel %vm672, %v664, 0
  %v692 = vsel %vm672, %v665, 0
  %v695 = vsel %vm672, %v666, 0
  %697 = vmatprep.subr.mxu0 0.0
  %698 = vmatpush1.msra.mxu0 0.0
  %699 = vmatprep.subr.mxu0 0.0
  %700 = vmatpush1.msra.mxu0 0.0
  %701 = vmatprep.subr.mxu0 0.0
  %702 = vmatpush1.msra.mxu0 0.0
  %703 = vmatprep.subr.mxu0 0.0
  %704 = vmatpush1.msra.mxu0 0.0
  %705 = vmatprep.subr.mxu0 0.0
  %706 = vmatpush1.msra.mxu0 0.0
  %707 = vmatprep.subr.mxu0 0.0
  %708 = vmatpush1.msra.mxu0 0.0
  %709 = vmatprep.subr.mxu0 0.0
  %710 = vmatpush1.msra.mxu0 0.0
  %711 = vmatprep.subr.mxu0 0.0
  %712 = vmatpush1.msra.mxu0 0.0
  %713 = vmatprep.subr.mxu0 0.0
  %714 = vmatpush1.msra.mxu0 0.0
  %715 = vmatprep.subr.mxu0 0.0
  %716 = vmatpush1.msra.mxu0 0.0
  %717 = vmatprep.subr.mxu0 0.0
  %718 = vmatpush1.msra.mxu0 0.0
  %719 = vmatprep.subr.mxu0 0.0
  %720 = vmatpush1.msra.mxu0 0.0
  %721 = vmatprep.subr.mxu0 0.0
  %722 = vmatpush1.msra.mxu0 %v670
  %723 = vmatprep.subr.mxu0 0.0
  %724 = vmatpush1.msra.mxu0 %v669
  %725 = vmatprep.subr.mxu0 0.0
  %726 = vmatpush1.msra.mxu0 %v668
  %727 = vmatprep.subr.mxu0 0.0
  %728 = vmatpush1.msra.mxu0 %v667
  %729 = vmatprep.subr.mxu0 0.0
  %730 = vmatpush2.msra.mxu0 0.0
  %731 = vmatprep.subr.mxu0 0.0
  %732 = vmatpush2.msra.mxu0 0.0
  %733 = vmatprep.subr.mxu0 0.0
  %734 = vmatpush2.msra.mxu0 0.0
  %735 = vmatprep.subr.mxu0 0.0
  %736 = vmatpush2.msra.mxu0 0.0
  %737 = vmatprep.subr.mxu0 0.0
  %738 = vmatpush2.msra.mxu0 0.0
  %739 = vmatprep.subr.mxu0 0.0
  %740 = vmatpush2.msra.mxu0 0.0
  %741 = vmatprep.subr.mxu0 0.0
  %742 = vmatpush2.msra.mxu0 0.0
  %743 = vmatprep.subr.mxu0 0.0
  %744 = vmatpush2.msra.mxu0 0.0
  %745 = vmatprep.subr.mxu0 0.0
  %746 = vmatpush2.msra.mxu0 0.0
  %747 = vmatprep.subr.mxu0 0.0
  %748 = vmatpush2.msra.mxu0 0.0
  %749 = vmatprep.subr.mxu0 0.0
  %750 = vmatpush2.msra.mxu0 0.0
  %751 = vmatprep.subr.mxu0 0.0
  %752 = vmatpush2.msra.mxu0 0.0
  %753 = vmatprep.subr.mxu0 0.0
  %754 = vmatpush2.msra.mxu0 0.0
  %755 = vmatprep.subr.mxu0 0.0
  %756 = vmatpush2.msra.mxu0 0.0
  %757 = vmatprep.subr.mxu0 0.0
  %758 = vmatpush2.msra.mxu0 0.0
  %759 = vmatprep.subr.mxu0 0.0
  %760 = vmatpush2.msra.mxu0 0.0
  %761 = vmatprep.mubr.f32.mxu0 0.0
  %762 = vmatmul.mubr.f32.gmra.mxu0 %v674
  %v763 = vpop.f32.mrf.mxu0
  %v764 = vadd.f32 %v671, %v763
  %v765 = vpop.f32.mrf.mxu0
  %766 = vmatprep.mubr.f32.mxu0 0.0
  %767 = vmatmul.mubr.f32.gmra.mxu0 %v677
  %v768 = vpop.f32.mrf.mxu0
  %v769 = vadd.f32 %v671, %v768
  %v770 = vpop.f32.mrf.mxu0
  %771 = vmatprep.mubr.f32.mxu0 0.0
  %772 = vmatmul.mubr.f32.gmra.mxu0 %v680
  %v773 = vpop.f32.mrf.mxu0
  %v774 = vadd.f32 %v671, %v773
  %v775 = vpop.f32.mrf.mxu0
  %776 = vmatprep.mubr.f32.mxu0 0.0
  %777 = vmatmul.mubr.f32.gmra.mxu0 %v683
  %v778 = vpop.f32.mrf.mxu0
  %v779 = vadd.f32 %v671, %v778
  %v780 = vpop.f32.mrf.mxu0
  %781 = vmatprep.mubr.f32.mxu0 0.0
  %782 = vmatmul.mubr.f32.gmra.mxu0 %v686
  %v783 = vpop.f32.mrf.mxu0
  %v784 = vadd.f32 %v671, %v783
  %v785 = vpop.f32.mrf.mxu0
  %786 = vmatprep.mubr.f32.mxu0 0.0
  %787 = vmatmul.mubr.f32.gmra.mxu0 %v689
  %v788 = vpop.f32.mrf.mxu0
  %v789 = vadd.f32 %v671, %v788
  %v790 = vpop.f32.mrf.mxu0
  %791 = vmatprep.mubr.f32.mxu0 0.0
  %792 = vmatmul.mubr.f32.gmra.mxu0 %v692
  %v793 = vpop.f32.mrf.mxu0
  %v794 = vadd.f32 %v671, %v793
  %v795 = vpop.f32.mrf.mxu0
  %796 = vmatprep.mubr.f32.mxu0 0.0
  %797 = vmatmul.mubr.f32.gmra.mxu0 %v695
  %v798 = vpop.f32.mrf.mxu0
  %v799 = vadd.f32 %v671, %v798
  %v800 = vpop.f32.mrf.mxu0
  %801 = vdwg.mxu0
  %vm802 = vcmask 15360
  %803 = vst.msk [vmem:[%s7] sm:$0xff] %vm802, %v764
  %804 = vst.msk [vmem:[%s7 + $0x8] sm:$0xff] %vm802, %v769
  %805 = vst.msk [vmem:[%s7 + $0x10] sm:$0xff] %vm802, %v774
  %806 = vst.msk [vmem:[%s7 + $0x18] sm:$0xff] %vm802, %v779
  %807 = vst.msk [vmem:[%s7 + $0x20] sm:$0xff] %vm802, %v784
  %808 = vst.msk [vmem:[%s7 + $0x28] sm:$0xff] %vm802, %v789
  %809 = vst.msk [vmem:[%s7 + $0x30] sm:$0xff] %vm802, %v794
  %810 = vst.msk [vmem:[%s7 + $0x38] sm:$0xff] %vm802, %v799
  // Predicated region
  $region30: #{tpu_custom_call.1} parent=0 // pred_check
    _
  $region31: #{tpu_custom_call.1} parent=0 // pred_check_branch
    %812 = sbr.rel (0) target = $region33
  $region32: #{tpu_custom_call.1} parent=0 // pred_region
    _
  $region33: #{tpu_custom_call.1} parent=0 // pred_fallthru
    _
  // Predicated region
  $region34: #{tpu_custom_call.1} parent=0 // pred_check
    _
  $region35: #{tpu_custom_call.1} parent=0 // pred_check_branch
    %814 = sbr.rel (0) target = $region37
  $region36: #{tpu_custom_call.1} parent=0 // pred_region
    _
  $region37: #{tpu_custom_call.1} parent=0 // pred_fallthru
    _

</llo_original>
